<compile_context>
chip_gen: v7x
topology: tpu7x:2x2x1
jax: 0.10.0
libtpu: 0.0.40
codegen_flags: <defaults>
</compile_context>

<pallas_src>
import functools

import jax
import jax.numpy as jnp
from jax.experimental import pallas as pl
from jax.experimental.pallas import tpu as pltpu

HIDDEN = 64
HPAD = 128          # hidden lane dim zero-padded to one full vreg lane width


def _round_up(x, m):
    return (x + m - 1) // m * m


_BLOCK_CANDIDATES = (8192, 4096, 2048, 1024, 512, 256, 128, 64, 32, 16, 8)


def _choose_block(B, d_in, d_out, budget_bytes=12 << 20):
    """Pick a batch tile.

    Bigger tiles amortize the ~0.35us/grid-step overhead.  No ">=2 steps"
    requirement: on single-TC chips the grid is just a serial loop, and small
    batches fit a single tile.  The tile is bounded by a rough VMEM budget
    (double-buffered x/out + f32 intermediates) that stays under the most
    restrictive scoped-VMEM defaults.
    """
    per_row = 4 * (2 * d_in + 2 * d_out + 4 * HPAD)     # ~bytes of VMEM per batch row
    cap = max(8, min(8192, budget_bytes // per_row))
    if B <= cap:
        return B                                         # single full-batch tile
    for cand in _BLOCK_CANDIDATES:                       # largest divisor within budget
        if cand <= cap and B % cand == 0:
            return cand
    for cand in _BLOCK_CANDIDATES:                       # ragged B: wrapper zero-pads B up
        if cand <= cap:
            return cand
    return 8


def pad_params(w1, b1, w2, b2, w3, b3, *, use_cos=False, mxu_dtype=jnp.bfloat16):
    """Pre-pad / pre-cast weights once (outside the per-call jit).

    Hidden dim (64) is zero-padded to 128 so intermediates are lane-dense;
    w3's OUTPUT columns stay at the true d_out so the kernel's HBM writeback
    is exactly B*d_out.  Zero padding is exact: padded hidden columns stay 0
    through bias, relu and the following matmul.
    """
    w1p = jnp.pad(w1, ((0, 0), (0, HPAD - HIDDEN))).astype(mxu_dtype)
    b1p = jnp.pad(b1, ((0, 0), (0, HPAD - HIDDEN))).astype(jnp.float32)
    w3p = jnp.pad(w3, ((0, HPAD - HIDDEN), (0, 0))).astype(mxu_dtype)
    b3p = b3.astype(jnp.float32)
    if use_cos:
        return (w1p, b1p, w3p, b3p)
    w2p = jnp.pad(w2, ((0, HPAD - HIDDEN), (0, HPAD - HIDDEN))).astype(mxu_dtype)
    b2p = jnp.pad(b2, ((0, 0), (0, HPAD - HIDDEN))).astype(jnp.float32)
    return (w1p, b1p, w2p, b2p, w3p, b3p)


def _make_mlp_kernel(use_cos: bool, mxu_dtype):
    """Whole MLP forward fused into one kernel body (per batch tile)."""

    if use_cos:
        def kernel(x_ref, w1_ref, b1_ref, w3_ref, b3_ref, o_ref):
            x = jnp.cos(x_ref[...])                                   # f32 EUP (v5e-safe)
            h = jnp.dot(x.astype(mxu_dtype), w1_ref[...],
                        preferred_element_type=jnp.float32) + b1_ref[...]
            y = jnp.dot(h.astype(mxu_dtype), w3_ref[...],
                        preferred_element_type=jnp.float32) + b3_ref[...]
            o_ref[...] = y.astype(o_ref.dtype)
        return kernel

    def kernel(x_ref, w1_ref, b1_ref, w2_ref, b2_ref, w3_ref, b3_ref, o_ref):
        h = jnp.dot(x_ref[...].astype(mxu_dtype), w1_ref[...],
                    preferred_element_type=jnp.float32) + b1_ref[...]
        h = jnp.maximum(h, 0.0)                                       # f32 elementwise
        h = jnp.dot(h.astype(mxu_dtype), w2_ref[...],
                    preferred_element_type=jnp.float32) + b2_ref[...]
        y = jnp.dot(h.astype(mxu_dtype), w3_ref[...],
                    preferred_element_type=jnp.float32) + b3_ref[...]
        o_ref[...] = y.astype(o_ref.dtype)
    return kernel


@functools.partial(jax.jit, static_argnames=("use_cos", "block_b"))
def mlp_forward(x, padded_params, *, use_cos: bool = False, block_b: int | None = None):
    B, d_in = x.shape
    w1p = padded_params[0]
    w3p = padded_params[-2]
    mxu_dtype = w1p.dtype
    d_out = w3p.shape[1]

    if block_b is None:
        block_b = _choose_block(B, d_in, d_out)
    B_pad = _round_up(B, block_b)
    if B_pad != B:                       # ragged batch: pad with zero rows (exact)
        x = jnp.pad(x, ((0, B_pad - B), (0, 0)))
    grid = (B_pad // block_b,)

    x_spec = pl.BlockSpec((block_b, d_in), lambda i: (i, 0))
    w_spec = lambda shp: pl.BlockSpec(shp, lambda i: (0, 0))          # grid-resident weights
    out_spec = pl.BlockSpec((block_b, d_out), lambda i: (i, 0))       # true d_out, no padding
    in_specs = [x_spec] + [w_spec(p.shape) for p in padded_params]

    # Honest cost / VMEM bookkeeping (matches actual HBM traffic).
    w_bytes = sum(p.size * p.dtype.itemsize for p in padded_params)
    mm = d_in * HIDDEN + HIDDEN * d_out + (0 if use_cos else HIDDEN * HIDDEN)
    cost = pl.CostEstimate(
        flops=2 * B_pad * mm,
        transcendentals=B_pad * d_in if use_cos else 0,
        bytes_accessed=B_pad * (d_in + d_out) * 4 + w_bytes)

    vmem_need = (2 * block_b * (d_in + d_out) * 4       # double-buffered x + out tiles
                 + 4 * block_b * HPAD * 4               # f32 intermediates
                 + w_bytes + (2 << 20))                 # weights + slack
    vmem_limit = int(min(64 << 20, max(vmem_need, 16 << 20)))

    out = pl.pallas_call(
        _make_mlp_kernel(use_cos, mxu_dtype),
        out_shape=jax.ShapeDtypeStruct((B_pad, d_out), jnp.float32),
        grid_spec=pltpu.PrefetchScalarGridSpec(
            num_scalar_prefetch=0,
            grid=grid,
            in_specs=in_specs,
            out_specs=out_spec,
        ),
        compiler_params=pltpu.CompilerParams(
            dimension_semantics=("parallel",),
            vmem_limit_bytes=vmem_limit,
        ),
        cost_estimate=cost,
    )(x, *padded_params)

    return out[:B] if B_pad != B else out


def init_params(key, input_size, output_size):
    """Deterministic init; mimics PyTorch Linear U(-1/sqrt(fan_in), 1/sqrt(fan_in))."""
    ks = jax.random.split(key, 6)

    def linear(kw, kb, fan_in, fan_out):
        bound = 1.0 / jnp.sqrt(fan_in)
        w = jax.random.uniform(kw, (fan_in, fan_out), jnp.float32, -bound, bound)
        b = jax.random.uniform(kb, (1, fan_out), jnp.float32, -bound, bound)
        return w, b

    w1, b1 = linear(ks[0], ks[1], input_size, HIDDEN)
    w2, b2 = linear(ks[2], ks[3], HIDDEN, HIDDEN)
    w3, b3 = linear(ks[4], ks[5], HIDDEN, output_size)
    return w1, b1, w2, b2, w3, b3


def mlp_reference(x, w1, b1, w2, b2, w3, b3, use_cos=False, mxu_dtype=jnp.float32):
    """Pure-JAX reference mirroring the kernel's dtype strategy."""
    def dot(a, w):
        return jnp.dot(a.astype(mxu_dtype), w.astype(mxu_dtype),
                       preferred_element_type=jnp.float32)
    if use_cos:
        hidden = dot(jnp.cos(x), w1) + b1
    else:
        hidden = dot(jnp.maximum(dot(x, w1) + b1, 0.0), w2) + b2
    return dot(hidden, w3) + b3


if __name__ == "__main__":
    key = jax.random.PRNGKey(0)
    k_param, k_x = jax.random.split(key)

    input_size, output_size = 32, 16
    batch = 16

    raw = init_params(k_param, input_size, output_size)
    x = jax.random.normal(k_x, (batch, input_size), jnp.float32)

    ok = True
    for use_cos in (False, True):
        for mxu_dtype, tol in ((jnp.float32, 1e-5), (jnp.bfloat16, 5e-3)):
            padded = pad_params(*raw, use_cos=use_cos, mxu_dtype=mxu_dtype)
            y = jax.block_until_ready(mlp_forward(x, padded, use_cos=use_cos))
            r = mlp_reference(x, *raw, use_cos=use_cos, mxu_dtype=mxu_dtype)
            if y.shape != r.shape or not jnp.allclose(y, r, atol=tol, rtol=tol):
                ok = False
                print(f"MISMATCH use_cos={use_cos} mxu={jnp.dtype(mxu_dtype).name}: "
                      f"max abs err = {jnp.max(jnp.abs(y - r))}")

    # Ragged batch + multi-step grid path (exercises the zero-pad-tail logic).
    xr = jax.random.normal(k_x, (20, input_size), jnp.float32)
    padded = pad_params(*raw, use_cos=False, mxu_dtype=jnp.float32)
    yr = jax.block_until_ready(mlp_forward(xr, padded, use_cos=False, block_b=8))
    rr = mlp_reference(xr, *raw, use_cos=False, mxu_dtype=jnp.float32)
    if yr.shape != rr.shape or not jnp.allclose(yr, rr, atol=1e-5, rtol=1e-5):
        ok = False
        print(f"MISMATCH ragged batch: max abs err = {jnp.max(jnp.abs(yr - rr))}")

    if ok:
        print("KERNEL_OK")
</pallas_src>

<mosaic_0001>
module attributes {stable_mosaic.version = 11 : i64} {
  func.func @kernel(%arg0: i32, %arg1: memref<16x32xf32, #tpu.memory_space<vmem>>, %arg2: memref<32x128xf32, #tpu.memory_space<vmem>>, %arg3: memref<1x128xf32, #tpu.memory_space<vmem>>, %arg4: memref<128x128xf32, #tpu.memory_space<vmem>>, %arg5: memref<1x128xf32, #tpu.memory_space<vmem>>, %arg6: memref<128x16xf32, #tpu.memory_space<vmem>>, %arg7: memref<1x16xf32, #tpu.memory_space<vmem>>, %arg8: memref<16x16xf32, #tpu.memory_space<vmem>>) attributes {dimension_semantics = [#tpu.dimension_semantics<parallel>], iteration_bounds = array<i64: 1>, scalar_prefetch = 0 : i64, scratch_operands = 0 : i64, tpu.core_type = #tpu.core_type<tc>, window_params = [{transform_indices = @transform_0, window_bounds = array<i64: 16, 32>}, {pipeline_mode = #tpu.pipeline_mode<synchronous>, transform_indices = @transform_1, window_bounds = array<i64: 32, 128>}, {pipeline_mode = #tpu.pipeline_mode<synchronous>, transform_indices = @transform_2, window_bounds = array<i64: 1, 128>}, {pipeline_mode = #tpu.pipeline_mode<synchronous>, transform_indices = @transform_3, window_bounds = array<i64: 128, 128>}, {pipeline_mode = #tpu.pipeline_mode<synchronous>, transform_indices = @transform_4, window_bounds = array<i64: 1, 128>}, {pipeline_mode = #tpu.pipeline_mode<synchronous>, transform_indices = @transform_5, window_bounds = array<i64: 128, 16>}, {pipeline_mode = #tpu.pipeline_mode<synchronous>, transform_indices = @transform_6, window_bounds = array<i64: 1, 16>}, {transform_indices = @transform_7, window_bounds = array<i64: 16, 16>}]} {
    %c0 = arith.constant 0 : index
    %c0_0 = arith.constant 0 : index
    %0 = vector.load %arg1[%c0, %c0_0] : memref<16x32xf32, #tpu.memory_space<vmem>>, vector<16x32xf32>
    %c0_1 = arith.constant 0 : index
    %c0_2 = arith.constant 0 : index
    %1 = vector.load %arg2[%c0_1, %c0_2] : memref<32x128xf32, #tpu.memory_space<vmem>>, vector<32x128xf32>
    %cst = arith.constant dense<0.000000e+00> : vector<16x128xf32>
    %2 = tpu.matmul %0, %1, %cst {dimension_numbers = #tpu.dot_dimension_numbers<[1], [0], [0], [1], [0, 0, 1, 1], [], []>} : vector<16x32xf32>, vector<32x128xf32>, vector<16x128xf32> -> vector<16x128xf32>
    %c0_3 = arith.constant 0 : index
    %c0_4 = arith.constant 0 : index
    %3 = vector.load %arg3[%c0_3, %c0_4] : memref<1x128xf32, #tpu.memory_space<vmem>>, vector<1x128xf32>
    %4 = vector.broadcast %3 : vector<1x128xf32> to vector<16x128xf32>
    %5 = arith.addf %2, %4 : vector<16x128xf32>
    %cst_5 = arith.constant 0.000000e+00 : f32
    %6 = vector.broadcast %cst_5 : f32 to vector<16x128xf32>
    %7 = arith.maximumf %5, %6 : vector<16x128xf32>
    %c0_6 = arith.constant 0 : index
    %c0_7 = arith.constant 0 : index
    %8 = vector.load %arg4[%c0_6, %c0_7] : memref<128x128xf32, #tpu.memory_space<vmem>>, vector<128x128xf32>
    %cst_8 = arith.constant dense<0.000000e+00> : vector<16x128xf32>
    %9 = tpu.matmul %7, %8, %cst_8 {dimension_numbers = #tpu.dot_dimension_numbers<[1], [0], [0], [1], [0, 0, 1, 1], [], []>} : vector<16x128xf32>, vector<128x128xf32>, vector<16x128xf32> -> vector<16x128xf32>
    %c0_9 = arith.constant 0 : index
    %c0_10 = arith.constant 0 : index
    %10 = vector.load %arg5[%c0_9, %c0_10] : memref<1x128xf32, #tpu.memory_space<vmem>>, vector<1x128xf32>
    %11 = vector.broadcast %10 : vector<1x128xf32> to vector<16x128xf32>
    %12 = arith.addf %9, %11 : vector<16x128xf32>
    %c0_11 = arith.constant 0 : index
    %c0_12 = arith.constant 0 : index
    %13 = vector.load %arg6[%c0_11, %c0_12] : memref<128x16xf32, #tpu.memory_space<vmem>>, vector<128x16xf32>
    %cst_13 = arith.constant dense<0.000000e+00> : vector<16x16xf32>
    %14 = tpu.matmul %12, %13, %cst_13 {dimension_numbers = #tpu.dot_dimension_numbers<[1], [0], [0], [1], [0, 0, 1, 1], [], []>} : vector<16x128xf32>, vector<128x16xf32>, vector<16x16xf32> -> vector<16x16xf32>
    %c0_14 = arith.constant 0 : index
    %c0_15 = arith.constant 0 : index
    %15 = vector.load %arg7[%c0_14, %c0_15] : memref<1x16xf32, #tpu.memory_space<vmem>>, vector<1x16xf32>
    %16 = vector.broadcast %15 : vector<1x16xf32> to vector<16x16xf32>
    %17 = arith.addf %14, %16 : vector<16x16xf32>
    %c0_16 = arith.constant 0 : index
    %c0_17 = arith.constant 0 : index
    %18 = vector.load %arg8[%c0_16, %c0_17] : memref<16x16xf32, #tpu.memory_space<vmem>>, vector<16x16xf32>
    tpu.vector_store %arg8[%c0_16, %c0_17], %17 {strides = array<i32>} : memref<16x16xf32, #tpu.memory_space<vmem>>, vector<16x16xf32>,
    return
  }
  func.func @transform_0(%arg0: i32) -> (i32, i32) {
    %c0_i32 = arith.constant 0 : i32
    %c0_i32_0 = arith.constant 0 : i32
    return %arg0, %c0_i32 : i32, i32
  }
  func.func @transform_1(%arg0: i32) -> (i32, i32) {
    %c0_i32 = arith.constant 0 : i32
    %c0_i32_0 = arith.constant 0 : i32
    %c0_i32_1 = arith.constant 0 : i32
    return %c0_i32, %c0_i32_0 : i32, i32
  }
  func.func @transform_2(%arg0: i32) -> (i32, i32) {
    %c0_i32 = arith.constant 0 : i32
    %c0_i32_0 = arith.constant 0 : i32
    %c0_i32_1 = arith.constant 0 : i32
    return %c0_i32, %c0_i32_0 : i32, i32
  }
  func.func @transform_3(%arg0: i32) -> (i32, i32) {
    %c0_i32 = arith.constant 0 : i32
    %c0_i32_0 = arith.constant 0 : i32
    %c0_i32_1 = arith.constant 0 : i32
    return %c0_i32, %c0_i32_0 : i32, i32
  }
  func.func @transform_4(%arg0: i32) -> (i32, i32) {
    %c0_i32 = arith.constant 0 : i32
    %c0_i32_0 = arith.constant 0 : i32
    %c0_i32_1 = arith.constant 0 : i32
    return %c0_i32, %c0_i32_0 : i32, i32
  }
  func.func @transform_5(%arg0: i32) -> (i32, i32) {
    %c0_i32 = arith.constant 0 : i32
    %c0_i32_0 = arith.constant 0 : i32
    %c0_i32_1 = arith.constant 0 : i32
    return %c0_i32, %c0_i32_0 : i32, i32
  }
  func.func @transform_6(%arg0: i32) -> (i32, i32) {
    %c0_i32 = arith.constant 0 : i32
    %c0_i32_0 = arith.constant 0 : i32
    %c0_i32_1 = arith.constant 0 : i32
    return %c0_i32, %c0_i32_0 : i32, i32
  }
  func.func @transform_7(%arg0: i32) -> (i32, i32) {
    %c0_i32 = arith.constant 0 : i32
    %c0_i32_0 = arith.constant 0 : i32
    return %arg0, %c0_i32 : i32, i32
  }
}

</mosaic_0001>

<llo_original>
// kernel: mlp_forward.1
$region0: #{mlp_forward.1}
  #allocation0 [shape = 'u32[]', space=smem, size = 0x4, offset = 0x4, fixed_abs, tag = 'smem constant byte address 0x4 - core index']
  #allocation1 [shape = 'u32[144,128]{1,0:T(1,128)}', space=vmem, size = 0x12000, scoped, tag = 'internal scratch']
  %s0 = inlined_call_operand.vmem [shape: f32[16,32], index: 0, kind: input, shape index: {}]
  %s1 = inlined_call_operand.hbm [shape: f32[32,128], index: 1, kind: input, shape index: {}]
  %s2 = inlined_call_operand.vmem [shape: f32[1,128], index: 2, kind: input, shape index: {}]
  %s3 = inlined_call_operand.vmem [shape: f32[128,128], index: 3, kind: input, shape index: {}]
  %s4 = inlined_call_operand.vmem [shape: f32[1,128], index: 4, kind: input, shape index: {}]
  %s5 = inlined_call_operand.vmem [shape: f32[128,16], index: 5, kind: input, shape index: {}]
  %s6 = inlined_call_operand.vmem [shape: f32[1,16], index: 6, kind: input, shape index: {}]
  %s7 = inlined_call_operand.hbm [shape: f32[16,16], index: 7, kind: output, shape index: {}]
  %s8 = sld [smem:[#allocation0]]
  $region42: #{mlp_forward.1} parent=0
    _
  %s10 = ssub.s32 1, %s8
  %s11 = scalar_select 0, %s10, %s8
  $region1: #{mlp_forward.1} parent=0
    #allocation2 [shape = 'u8[16384]{0}', space=vmem, size = 0x4000, scoped, tag = 'input window, operand 1, single buffered']
    #allocation3 [shape = 's32[1]{0}', space=sflag, size = 0x4, scoped, tag = 'scoped memory for mlp_forward.1']
    #allocation4 [shape = 's32[1]{0}', space=sflag, size = 0x4, scoped, tag = 'scoped memory for mlp_forward.1']
    #allocation5 [shape = 'u8[8192]{0}', space=vmem, size = 0x2000, scoped, tag = 'output window, operand 0, single buffered']
    %12 = vsyncpa [#allocation3], 0
    %13 = vsyncpa [#allocation4], 0
    // Predicated region
    $region2: #{mlp_forward.1} parent=1 // pred_check
      _
    $region3: #{mlp_forward.1} parent=1 // pred_check_branch
      %15 = sbr.rel (0) target = $region5
    $region4: #{mlp_forward.1} parent=1 // pred_region
      _
    $region5: #{mlp_forward.1} parent=1 // pred_fallthru
      _
    // Predicated region
    $region6: #{mlp_forward.1} parent=1 // pred_check
      _
    $region7: #{mlp_forward.1} parent=1 // pred_check_branch
      %17 = sbr.rel (0) target = $region9
    $region8: #{mlp_forward.1} parent=1 // pred_region
      %s19 = ssub.s32 512, 512
      %20 = vsyncadd [#allocation3], %s19
      %s21 = sshll.u32 [#allocation2], 4
      %s22 = int_to_ptr.vmem [resolvable:$true] %s21
      %27 = dma.hbm_to_vmem [thread:$0]  %s1, 512, %s22, [#allocation3], 128, 128, 8
    $region9: #{mlp_forward.1} parent=1 // pred_fallthru
      _
    // Predicated region
    $region10: #{mlp_forward.1} parent=1 // pred_check
      _
    $region11: #{mlp_forward.1} parent=1 // pred_check_branch
      %29 = sbr.rel (0) target = $region13
    $region12: #{mlp_forward.1} parent=1 // pred_region
      _
    $region13: #{mlp_forward.1} parent=1 // pred_fallthru
      _
    // Predicated region
    $region14: #{mlp_forward.1} parent=1 // pred_check
      _
    $region15: #{mlp_forward.1} parent=1 // pred_check_branch
      %31 = sbr.rel (0) target = $region17
    $region16: #{mlp_forward.1} parent=1 // pred_region
      _
    $region17: #{mlp_forward.1} parent=1 // pred_fallthru
      _
    // Predicated region
    $region18: #{mlp_forward.1} parent=1 // pred_check
      _
    $region19: #{mlp_forward.1} parent=1 // pred_check_branch
      %33 = sbr.rel (0) target = $region21
    $region20: #{mlp_forward.1} parent=1 // pred_region
      _
    $region21: #{mlp_forward.1} parent=1 // pred_fallthru
      _
    // Predicated region
    $region22: #{mlp_forward.1} parent=1 // pred_check
      _
    $region23: #{mlp_forward.1} parent=1 // pred_check_branch
      %35 = sbr.rel (0) target = $region25
    $region24: #{mlp_forward.1} parent=1 // pred_region
      _
    $region25: #{mlp_forward.1} parent=1 // pred_fallthru
      _
    // Predicated region
    $region26: #{mlp_forward.1} parent=1 // pred_check
      _
    $region27: #{mlp_forward.1} parent=1 // pred_check_branch
      %37 = sbr.rel (0) target = $region29
    $region28: #{mlp_forward.1} parent=1 // pred_region
      _
    $region29: #{mlp_forward.1} parent=1 // pred_fallthru
      _
    // Predicated region
    $region30: #{mlp_forward.1} parent=1 // pred_check
      _
    $region31: #{mlp_forward.1} parent=1 // pred_check_branch
      %39 = sbr.rel (0) target = $region33
    $region32: #{mlp_forward.1} parent=1 // pred_region
      %40 = dma.done [#allocation3], 512
    $region33: #{mlp_forward.1} parent=1 // pred_fallthru
      _
    %v41 = vld [vmem:[%s0] sm:$0xff]
    %v42 = vld [vmem:[%s0 + $0x8] sm:$0xff]
    %v43 = vld [vmem:[#allocation2] sm:$0xff]
    %v44 = vld [vmem:[#allocation2 + $0x8] sm:$0xff]
    %v45 = vld [vmem:[#allocation2 + $0x10] sm:$0xff]
    %v46 = vld [vmem:[#allocation2 + $0x18] sm:$0xff]
    %v47 = vld [vmem:[%s2] sm:$0x1]
    %v49 = vlaneseq
    %v50 = vshrl.u32 %v49, 7
    %v51 = vsub.s32 0, %v50
    %v52 = vrot.slane %v47, %v51
    %vm54 = vcmask 261120
    %v56 = vsel %vm54, %v41, 0
    %v59 = vsel %vm54, %v42, 0
    %61 = vmatprep.subr.mxu0 0.0
    %62 = vmatpush1.msra.mxu0 %v43
    %63 = vmatprep.subr.mxu0 0.0
    %64 = vmatpush1.msra.mxu0 %v44
    %65 = vmatprep.subr.mxu0 0.0
    %66 = vmatpush1.msra.mxu0 %v45
    %67 = vmatprep.subr.mxu0 0.0
    %68 = vmatpush1.msra.mxu0 %v46
    %69 = vmatprep.subr.mxu0 0.0
    %70 = vmatpush1.msra.mxu0 0.0
    %71 = vmatprep.subr.mxu0 0.0
    %72 = vmatpush1.msra.mxu0 0.0
    %73 = vmatprep.subr.mxu0 0.0
    %74 = vmatpush1.msra.mxu0 0.0
    %75 = vmatprep.subr.mxu0 0.0
    %76 = vmatpush1.msra.mxu0 0.0
    %77 = vmatprep.subr.mxu0 0.0
    %78 = vmatpush1.msra.mxu0 0.0
    %79 = vmatprep.subr.mxu0 0.0
    %80 = vmatpush1.msra.mxu0 0.0
    %81 = vmatprep.subr.mxu0 0.0
    %82 = vmatpush1.msra.mxu0 0.0
    %83 = vmatprep.subr.mxu0 0.0
    %84 = vmatpush1.msra.mxu0 0.0
    %85 = vmatprep.subr.mxu0 0.0
    %86 = vmatpush1.msra.mxu0 0.0
    %87 = vmatprep.subr.mxu0 0.0
    %88 = vmatpush1.msra.mxu0 0.0
    %89 = vmatprep.subr.mxu0 0.0
    %90 = vmatpush1.msra.mxu0 0.0
    %91 = vmatprep.subr.mxu0 0.0
    %92 = vmatpush1.msra.mxu0 0.0
    %93 = vmatprep.subr.mxu0 0.0
    %94 = vmatpush1.msra.mxu0 0.0
    %95 = vmatprep.subr.mxu0 0.0
    %96 = vmatpush1.msra.mxu0 0.0
    %97 = vmatprep.subr.mxu0 0.0
    %98 = vmatpush1.msra.mxu0 0.0
    %99 = vmatprep.subr.mxu0 0.0
    %100 = vmatpush1.msra.mxu0 0.0
    %101 = vmatprep.subr.mxu0 0.0
    %102 = vmatpush1.msra.mxu0 0.0
    %103 = vmatprep.subr.mxu0 0.0
    %104 = vmatpush1.msra.mxu0 0.0
    %105 = vmatprep.subr.mxu0 0.0
    %106 = vmatpush1.msra.mxu0 0.0
    %107 = vmatprep.subr.mxu0 0.0
    %108 = vmatpush1.msra.mxu0 0.0
    %109 = vmatprep.subr.mxu0 0.0
    %110 = vmatpush1.msra.mxu0 0.0
    %111 = vmatprep.subr.mxu0 0.0
    %112 = vmatpush1.msra.mxu0 0.0
    %113 = vmatprep.subr.mxu0 0.0
    %114 = vmatpush1.msra.mxu0 0.0
    %115 = vmatprep.subr.mxu0 0.0
    %116 = vmatpush1.msra.mxu0 0.0
    %117 = vmatprep.subr.mxu0 0.0
    %118 = vmatpush1.msra.mxu0 0.0
    %119 = vmatprep.subr.mxu0 0.0
    %120 = vmatpush1.msra.mxu0 0.0
    %121 = vmatprep.subr.mxu0 0.0
    %122 = vmatpush1.msra.mxu0 0.0
    %123 = vmatprep.subr.mxu0 0.0
    %124 = vmatpush1.msra.mxu0 0.0
    %125 = vmatprep.mubr.f32.mxu0 0.0
    %126 = vmatmul.mubr.f32.gmra.mrb[0].mxu0 %v56
    %v127 = vpop.f32.mrb[0].mxu0
    %v128 = vadd.f32 %v52, %v127
    %v129 = vpop.f32.mrb[0].mxu0
    %130 = vmatprep.mubr.f32.mxu0 0.0
    %131 = vmatmul.mubr.f32.gmra.mrb[0].mxu0 %v59
    %v132 = vpop.f32.mrb[0].mxu0
    %v133 = vadd.f32 %v52, %v132
    %v134 = vpop.f32.mrb[0].mxu0
    %135 = vdwg.mxu0
    %v136 = vmax.f32 %v128, 0.0
    %v137 = vmax.f32 %v133, 0.0
    %v138 = vld [vmem:[%s3] sm:$0xff]
    %v139 = vld [vmem:[%s3 + $0x8] sm:$0xff]
    %v140 = vld [vmem:[%s3 + $0x10] sm:$0xff]
    %v141 = vld [vmem:[%s3 + $0x18] sm:$0xff]
    %v142 = vld [vmem:[%s3 + $0x20] sm:$0xff]
    %v143 = vld [vmem:[%s3 + $0x28] sm:$0xff]
    %v144 = vld [vmem:[%s3 + $0x30] sm:$0xff]
    %v145 = vld [vmem:[%s3 + $0x38] sm:$0xff]
    %v146 = vld [vmem:[%s3 + $0x40] sm:$0xff]
    %v147 = vld [vmem:[%s3 + $0x48] sm:$0xff]
    %v148 = vld [vmem:[%s3 + $0x50] sm:$0xff]
    %v149 = vld [vmem:[%s3 + $0x58] sm:$0xff]
    %v150 = vld [vmem:[%s3 + $0x60] sm:$0xff]
    %v151 = vld [vmem:[%s3 + $0x68] sm:$0xff]
    %v152 = vld [vmem:[%s3 + $0x70] sm:$0xff]
    %v153 = vld [vmem:[%s3 + $0x78] sm:$0xff]
    %v154 = vld [vmem:[%s4] sm:$0x1]
    %v156 = vlaneseq
    %v157 = vshrl.u32 %v156, 7
    %v158 = vsub.s32 0, %v157
    %v159 = vrot.slane %v154, %v158
    %161 = vmatprep.subr.mxu0 0.0
    %162 = vmatpush1.msra.mxu0 %v138
    %163 = vmatprep.subr.mxu0 0.0
    %164 = vmatpush1.msra.mxu0 %v139
    %165 = vmatprep.subr.mxu0 0.0
    %166 = vmatpush1.msra.mxu0 %v140
    %167 = vmatprep.subr.mxu0 0.0
    %168 = vmatpush1.msra.mxu0 %v141
    %169 = vmatprep.subr.mxu0 0.0
    %170 = vmatpush1.msra.mxu0 %v142
    %171 = vmatprep.subr.mxu0 0.0
    %172 = vmatpush1.msra.mxu0 %v143
    %173 = vmatprep.subr.mxu0 0.0
    %174 = vmatpush1.msra.mxu0 %v144
    %175 = vmatprep.subr.mxu0 0.0
    %176 = vmatpush1.msra.mxu0 %v145
    %177 = vmatprep.subr.mxu0 0.0
    %178 = vmatpush1.msra.mxu0 %v146
    %179 = vmatprep.subr.mxu0 0.0
    %180 = vmatpush1.msra.mxu0 %v147
    %181 = vmatprep.subr.mxu0 0.0
    %182 = vmatpush1.msra.mxu0 %v148
    %183 = vmatprep.subr.mxu0 0.0
    %184 = vmatpush1.msra.mxu0 %v149
    %185 = vmatprep.subr.mxu0 0.0
    %186 = vmatpush1.msra.mxu0 %v150
    %187 = vmatprep.subr.mxu0 0.0
    %188 = vmatpush1.msra.mxu0 %v151
    %189 = vmatprep.subr.mxu0 0.0
    %190 = vmatpush1.msra.mxu0 %v152
    %191 = vmatprep.subr.mxu0 0.0
    %192 = vmatpush1.msra.mxu0 %v153
    %193 = vmatprep.subr.mxu0 0.0
    %194 = vmatpush1.msra.mxu0 0.0
    %195 = vmatprep.subr.mxu0 0.0
    %196 = vmatpush1.msra.mxu0 0.0
    %197 = vmatprep.subr.mxu0 0.0
    %198 = vmatpush1.msra.mxu0 0.0
    %199 = vmatprep.subr.mxu0 0.0
    %200 = vmatpush1.msra.mxu0 0.0
    %201 = vmatprep.subr.mxu0 0.0
    %202 = vmatpush1.msra.mxu0 0.0
    %203 = vmatprep.subr.mxu0 0.0
    %204 = vmatpush1.msra.mxu0 0.0
    %205 = vmatprep.subr.mxu0 0.0
    %206 = vmatpush1.msra.mxu0 0.0
    %207 = vmatprep.subr.mxu0 0.0
    %208 = vmatpush1.msra.mxu0 0.0
    %209 = vmatprep.subr.mxu0 0.0
    %210 = vmatpush1.msra.mxu0 0.0
    %211 = vmatprep.subr.mxu0 0.0
    %212 = vmatpush1.msra.mxu0 0.0
    %213 = vmatprep.subr.mxu0 0.0
    %214 = vmatpush1.msra.mxu0 0.0
    %215 = vmatprep.subr.mxu0 0.0
    %216 = vmatpush1.msra.mxu0 0.0
    %217 = vmatprep.subr.mxu0 0.0
    %218 = vmatpush1.msra.mxu0 0.0
    %219 = vmatprep.subr.mxu0 0.0
    %220 = vmatpush1.msra.mxu0 0.0
    %221 = vmatprep.subr.mxu0 0.0
    %222 = vmatpush1.msra.mxu0 0.0
    %223 = vmatprep.subr.mxu0 0.0
    %224 = vmatpush1.msra.mxu0 0.0
    %225 = vmatprep.mubr.f32.mxu0 0.0
    %226 = vmatmul.mubr.f32.gmra.mrb[0].mxu0 %v136
    %v227 = vpop.f32.mrb[0].mxu0
    %v228 = vadd.f32 %v159, %v227
    %v229 = vpop.f32.mrb[0].mxu0
    %230 = vmatprep.mubr.f32.mxu0 0.0
    %231 = vmatmul.mubr.f32.gmra.mrb[0].mxu0 %v137
    %v232 = vpop.f32.mrb[0].mxu0
    %v233 = vadd.f32 %v159, %v232
    %v234 = vpop.f32.mrb[0].mxu0
    %235 = vdwg.mxu0
    %v236 = vld [vmem:[%s5] sm:$0xff]
    %v237 = vld [vmem:[%s5 + $0x8] sm:$0xff]
    %v238 = vld [vmem:[%s5 + $0x10] sm:$0xff]
    %v239 = vld [vmem:[%s5 + $0x18] sm:$0xff]
    %v240 = vld [vmem:[%s5 + $0x20] sm:$0xff]
    %v241 = vld [vmem:[%s5 + $0x28] sm:$0xff]
    %v242 = vld [vmem:[%s5 + $0x30] sm:$0xff]
    %v243 = vld [vmem:[%s5 + $0x38] sm:$0xff]
    %v244 = vld [vmem:[%s5 + $0x40] sm:$0xff]
    %v245 = vld [vmem:[%s5 + $0x48] sm:$0xff]
    %v246 = vld [vmem:[%s5 + $0x50] sm:$0xff]
    %v247 = vld [vmem:[%s5 + $0x58] sm:$0xff]
    %v248 = vld [vmem:[%s5 + $0x60] sm:$0xff]
    %v249 = vld [vmem:[%s5 + $0x68] sm:$0xff]
    %v250 = vld [vmem:[%s5 + $0x70] sm:$0xff]
    %v251 = vld [vmem:[%s5 + $0x78] sm:$0xff]
    %v252 = vld [vmem:[%s6] sm:$0x1]
    %v254 = vlaneseq
    %v255 = vshrl.u32 %v254, 7
    %v256 = vsub.s32 0, %v255
    %v257 = vrot.slane %v252, %v256
    %259 = vmatprep.subr.mxu0 0.0
    %260 = vmatpush1.msra.mxu0 %v236
    %261 = vmatprep.subr.mxu0 0.0
    %262 = vmatpush1.msra.mxu0 %v237
    %263 = vmatprep.subr.mxu0 0.0
    %264 = vmatpush1.msra.mxu0 %v238
    %265 = vmatprep.subr.mxu0 0.0
    %266 = vmatpush1.msra.mxu0 %v239
    %267 = vmatprep.subr.mxu0 0.0
    %268 = vmatpush1.msra.mxu0 %v240
    %269 = vmatprep.subr.mxu0 0.0
    %270 = vmatpush1.msra.mxu0 %v241
    %271 = vmatprep.subr.mxu0 0.0
    %272 = vmatpush1.msra.mxu0 %v242
    %273 = vmatprep.subr.mxu0 0.0
    %274 = vmatpush1.msra.mxu0 %v243
    %275 = vmatprep.subr.mxu0 0.0
    %276 = vmatpush1.msra.mxu0 %v244
    %277 = vmatprep.subr.mxu0 0.0
    %278 = vmatpush1.msra.mxu0 %v245
    %279 = vmatprep.subr.mxu0 0.0
    %280 = vmatpush1.msra.mxu0 %v246
    %281 = vmatprep.subr.mxu0 0.0
    %282 = vmatpush1.msra.mxu0 %v247
    %283 = vmatprep.subr.mxu0 0.0
    %284 = vmatpush1.msra.mxu0 %v248
    %285 = vmatprep.subr.mxu0 0.0
    %286 = vmatpush1.msra.mxu0 %v249
    %287 = vmatprep.subr.mxu0 0.0
    %288 = vmatpush1.msra.mxu0 %v250
    %289 = vmatprep.subr.mxu0 0.0
    %290 = vmatpush1.msra.mxu0 %v251
    %291 = vmatprep.subr.mxu0 0.0
    %292 = vmatpush1.msra.mxu0 0.0
    %293 = vmatprep.subr.mxu0 0.0
    %294 = vmatpush1.msra.mxu0 0.0
    %295 = vmatprep.subr.mxu0 0.0
    %296 = vmatpush1.msra.mxu0 0.0
    %297 = vmatprep.subr.mxu0 0.0
    %298 = vmatpush1.msra.mxu0 0.0
    %299 = vmatprep.subr.mxu0 0.0
    %300 = vmatpush1.msra.mxu0 0.0
    %301 = vmatprep.subr.mxu0 0.0
    %302 = vmatpush1.msra.mxu0 0.0
    %303 = vmatprep.subr.mxu0 0.0
    %304 = vmatpush1.msra.mxu0 0.0
    %305 = vmatprep.subr.mxu0 0.0
    %306 = vmatpush1.msra.mxu0 0.0
    %307 = vmatprep.subr.mxu0 0.0
    %308 = vmatpush1.msra.mxu0 0.0
    %309 = vmatprep.subr.mxu0 0.0
    %310 = vmatpush1.msra.mxu0 0.0
    %311 = vmatprep.subr.mxu0 0.0
    %312 = vmatpush1.msra.mxu0 0.0
    %313 = vmatprep.subr.mxu0 0.0
    %314 = vmatpush1.msra.mxu0 0.0
    %315 = vmatprep.subr.mxu0 0.0
    %316 = vmatpush1.msra.mxu0 0.0
    %317 = vmatprep.subr.mxu0 0.0
    %318 = vmatpush1.msra.mxu0 0.0
    %319 = vmatprep.subr.mxu0 0.0
    %320 = vmatpush1.msra.mxu0 0.0
    %321 = vmatprep.subr.mxu0 0.0
    %322 = vmatpush1.msra.mxu0 0.0
    %323 = vmatprep.mubr.f32.mxu0 0.0
    %324 = vmatmul.mubr.f32.gmra.mrb[0].mxu0 %v228
    %v325 = vpop.f32.mrb[0].mxu0
    %v326 = vadd.f32 %v257, %v325
    %v327 = vpop.f32.mrb[0].mxu0
    %328 = vmatprep.mubr.f32.mxu0 0.0
    %329 = vmatmul.mubr.f32.gmra.mrb[0].mxu0 %v233
    %v330 = vpop.f32.mrb[0].mxu0
    %v331 = vadd.f32 %v257, %v330
    %v332 = vpop.f32.mrb[0].mxu0
    %333 = vdwg.mxu0
    %vm334 = vcmask 130048
    %335 = vst.msk [vmem:[#allocation5] sm:$0xff] %vm334, %v326
    %336 = vst.msk [vmem:[#allocation5 + $0x8] sm:$0xff] %vm334, %v331
    // Predicated region
    $region34: #{mlp_forward.1} parent=1 // pred_check
      _
    $region35: #{mlp_forward.1} parent=1 // pred_check_branch
      %338 = sbr.rel (0) target = $region37
    $region36: #{mlp_forward.1} parent=1 // pred_region
      %s340 = ssub.s32 256, 256
      %341 = vsyncadd [#allocation4], %s340
      %s342 = sshll.u32 [#allocation5], 4
      %s343 = int_to_ptr.vmem [resolvable:$true] %s342
      %348 = dma.vmem_to_hbm [thread:$0]  %s343, 256, %s7, [#allocation4], 128, 128, 8
    $region37: #{mlp_forward.1} parent=1 // pred_fallthru
      _
    // Predicated region
    $region38: #{mlp_forward.1} parent=1 // pred_check
      _
    $region39: #{mlp_forward.1} parent=1 // pred_check_branch
      %350 = sbr.rel (0) target = $region41
    $region40: #{mlp_forward.1} parent=1 // pred_region
      %351 = dma.done [#allocation4], 256
    $region41: #{mlp_forward.1} parent=1 // pred_fallthru
      _
    %352 = vsyncpa [#allocation3], 1
    %353 = vsyncpa [#allocation4], 1

</llo_original>
